<compile_context>
chip_gen: v5e
topology: v5e:2x2
jax: 0.10.0
libtpu: 0.0.40
codegen_flags: <defaults>
</compile_context>

<pallas_src>
import functools

import jax
import jax.numpy as jnp
from jax.experimental import pallas as pl
from jax.experimental.pallas import tpu as pltpu

_LANE = 128


def _cdiv(a: int, b: int) -> int:
    return (a + b - 1) // b


def _vmem_capacity_bytes() -> int:
    try:
        return int(pltpu.get_tpu_info().vmem_capacity_bytes)
    except Exception:
        return 64 << 20  # conservative fallback (v7x per-TensorCore)


def _choose_row_tile(B, F, itemsize, tile_budget_bytes, block_rows):
    """Row tile TB: either TB == B (single full block) or a multiple of 128."""
    if block_rows is not None:
        tb = max(_LANE, (int(block_rows) // _LANE) * _LANE)
    else:
        rows_fit = max(_LANE, tile_budget_bytes // max(1, F * itemsize))
        tb = max(_LANE, (rows_fit // _LANE) * _LANE)
        # Force >=2 grid steps when the batch is big enough so the "parallel"
        # axis shards across both TensorCores on v7x.
        if B >= 2 * _LANE:
            half = _cdiv(_cdiv(B, 2), _LANE) * _LANE
            tb = min(tb, half)
    if tb >= B:
        tb = B  # block shape == full array dims: always legal, grid == 1
    return tb


def _linear_kernel(x_ref, w_ref, b_ref, o_ref, *, apply_sigmoid: bool):
    # x_ref: (TB, F) VMEM   w_ref: (1, F) VMEM   b_ref: (1,) f32 SMEM   o_ref: (1, TB) VMEM
    # Contract on F with the batch dim landing on the lane axis: (1, F) . (TB, F)^T -> (1, TB).
    y = jax.lax.dot_general(
        w_ref[...],
        x_ref[...],
        dimension_numbers=(((1,), (1,)), ((), ())),
        preferred_element_type=jnp.float32,
    )
    y = y + b_ref[0]
    if apply_sigmoid:
        y = jax.nn.sigmoid(y)
    o_ref[...] = y.astype(o_ref.dtype)


def linear_model_forward(x, weight, bias, apply_sigmoid=False, block_rows=None):
    """Pallas equivalent of LinearModel.forward.

    x:      (batch, num_features)
    weight: (1, num_features)   (nn.Linear weight)
    bias:   (1,)                (nn.Linear bias)
    returns (batch, 1) in x.dtype
    """
    B, F = x.shape
    assert weight.shape == (1, F)
    # SMEM is a 32-bit scalar path: always hand it an f32 scalar.
    bias = jnp.asarray(bias).reshape((1,)).astype(jnp.float32)

    itemsize = jnp.dtype(x.dtype).itemsize
    out_itemsize = itemsize
    w_bytes = F * jnp.dtype(weight.dtype).itemsize

    # Per-generation scoped-VMEM ceiling: ~36 MiB on 64 MiB chips (v7x),
    # ~96 MiB on 128 MiB chips (v5e/v6e).
    vmem_cap = _vmem_capacity_bytes()
    scoped_cap = (36 << 20) if vmem_cap <= (64 << 20) else (96 << 20)
    tile_budget = min(32 << 20, (scoped_cap - (4 << 20)) // 2)

    TB = _choose_row_tile(B, F, itemsize, tile_budget, block_rows)
    grid = (_cdiv(B, TB),)
    padded = grid[0] * TB

    x_tile_bytes = TB * F * itemsize
    out_tile_bytes = TB * out_itemsize
    needed = 2 * (x_tile_bytes + out_tile_bytes + w_bytes) + (2 << 20)
    vmem_limit = int(min(max(needed, 16 << 20), scoped_cap))

    kernel = functools.partial(_linear_kernel, apply_sigmoid=apply_sigmoid)

    out = pl.pallas_call(
        kernel,
        out_shape=jax.ShapeDtypeStruct((1, padded), x.dtype),
        grid=grid,
        in_specs=[
            pl.BlockSpec((TB, F), lambda i: (i, 0)),   # x row tile (streamed, double-buffered)
            pl.BlockSpec((1, F), lambda i: (0, 0)),    # weight (resident)
            pl.BlockSpec(memory_space=pltpu.SMEM),     # bias scalar (f32, SMEM)
        ],
        out_specs=pl.BlockSpec((1, TB), lambda i: (0, i)),  # lane-dense output slab
        compiler_params=pltpu.CompilerParams(
            dimension_semantics=("parallel",),
            vmem_limit_bytes=vmem_limit,
        ),
        cost_estimate=pl.CostEstimate(
            flops=2 * B * F,
            transcendentals=B if apply_sigmoid else 0,
            bytes_accessed=B * F * itemsize + w_bytes + 4 + B * out_itemsize,
        ),
    )(x, weight, bias)

    # Free layout plumbing back to the module's (B, 1) output.
    return out.reshape((padded,))[:B].reshape((B, 1))


if __name__ == "__main__":
    key = jax.random.PRNGKey(0)
    batch, num_features = 8, 32

    kx, kw, kb, kx2 = jax.random.split(key, 4)
    x = jax.random.normal(kx, (batch, num_features), dtype=jnp.float32)

    # Deterministic PyTorch-like init: uniform(-1/sqrt(F), 1/sqrt(F))
    bound = 1.0 / jnp.sqrt(jnp.float32(num_features))
    weight = jax.random.uniform(kw, (1, num_features), jnp.float32, -bound, bound)
    bias = jax.random.uniform(kb, (1,), jnp.float32, -bound, bound)

    # Linear head (regression) and logistic head (sigmoid)
    out_lin = linear_model_forward(x, weight, bias, apply_sigmoid=False)
    out_sig = linear_model_forward(x, weight, bias, apply_sigmoid=True)
    jax.block_until_ready((out_lin, out_sig))

    ref_lin = x @ weight.T + bias
    ref_sig = jax.nn.sigmoid(ref_lin)
    assert out_lin.shape == (batch, 1)
    assert out_sig.shape == (batch, 1)
    assert jnp.allclose(out_lin, ref_lin, atol=1e-5)
    assert jnp.allclose(out_sig, ref_sig, atol=1e-5)

    # Exercise the tiled multi-block path (B not divisible by the 128-row tile,
    # partial last block + lane-dense output slab).
    B2 = 260
    x2 = jax.random.normal(kx2, (B2, num_features), dtype=jnp.float32)
    out2 = linear_model_forward(x2, weight, bias, apply_sigmoid=True, block_rows=128)
    jax.block_until_ready(out2)
    ref2 = jax.nn.sigmoid(x2 @ weight.T + bias)
    assert out2.shape == (B2, 1)
    assert jnp.allclose(out2, ref2, atol=1e-5)

    # Auto tile-selection path (per-generation VMEM budget, >=2 grid steps when large).
    out3 = linear_model_forward(x2, weight, bias, apply_sigmoid=False)
    jax.block_until_ready(out3)
    ref3 = x2 @ weight.T + bias
    assert out3.shape == (B2, 1)
    assert jnp.allclose(out3, ref3, atol=1e-5)

    print("KERNEL_OK")
</pallas_src>

<mosaic_0001>
module attributes {stable_mosaic.version = 11 : i64} {
  func.func @_linear_kernel(%arg0: i32, %arg1: memref<8x32xf32, #tpu.memory_space<vmem>>, %arg2: memref<1x32xf32, #tpu.memory_space<vmem>>, %arg3: memref<1xf32, #tpu.memory_space<smem>>, %arg4: memref<1x8xf32, #tpu.memory_space<vmem>>) attributes {dimension_semantics = [#tpu.dimension_semantics<parallel>], iteration_bounds = array<i64: 1>, scalar_prefetch = 0 : i64, scratch_operands = 0 : i64, tpu.core_type = #tpu.core_type<tc>, window_params = [{transform_indices = @transform_0, window_bounds = array<i64: 8, 32>}, {pipeline_mode = #tpu.pipeline_mode<synchronous>, transform_indices = @transform_1, window_bounds = array<i64: 1, 32>}, {transform_indices = @transform_2, window_bounds = array<i64: 1>}, {transform_indices = @transform_3, window_bounds = array<i64: 1, 8>}]} {
    %c0 = arith.constant 0 : index
    %c0_0 = arith.constant 0 : index
    %0 = vector.load %arg2[%c0, %c0_0] : memref<1x32xf32, #tpu.memory_space<vmem>>, vector<1x32xf32>
    %c0_1 = arith.constant 0 : index
    %c0_2 = arith.constant 0 : index
    %1 = vector.load %arg1[%c0_1, %c0_2] : memref<8x32xf32, #tpu.memory_space<vmem>>, vector<8x32xf32>
    %cst = arith.constant dense<0.000000e+00> : vector<1x8xf32>
    %2 = tpu.matmul %0, %1, %cst {dimension_numbers = #tpu.dot_dimension_numbers<[1], [1], [0], [0], [0, 0, 1, 0], [], []>} : vector<1x32xf32>, vector<8x32xf32>, vector<1x8xf32> -> vector<1x8xf32>
    %c0_3 = arith.constant 0 : index
    %3 = memref.load %arg3[%c0_3] : memref<1xf32, #tpu.memory_space<smem>>
    %4 = vector.broadcast %3 : f32 to vector<1x8xf32>
    %5 = arith.addf %2, %4 : vector<1x8xf32>
    %c0_4 = arith.constant 0 : index
    %c0_5 = arith.constant 0 : index
    %6 = vector.load %arg4[%c0_4, %c0_5] : memref<1x8xf32, #tpu.memory_space<vmem>>, vector<1x8xf32>
    tpu.vector_store %arg4[%c0_4, %c0_5], %5 {strides = array<i32>} : memref<1x8xf32, #tpu.memory_space<vmem>>, vector<1x8xf32>,
    return
  }
  func.func @transform_0(%arg0: i32) -> (i32, i32) {
    %c0_i32 = arith.constant 0 : i32
    %c0_i32_0 = arith.constant 0 : i32
    return %arg0, %c0_i32 : i32, i32
  }
  func.func @transform_1(%arg0: i32) -> (i32, i32) {
    %c0_i32 = arith.constant 0 : i32
    %c0_i32_0 = arith.constant 0 : i32
    %c0_i32_1 = arith.constant 0 : i32
    return %c0_i32, %c0_i32_0 : i32, i32
  }
  func.func @transform_2(%arg0: i32) -> i32 {
    %c0_i32 = arith.constant 0 : i32
    %c0_i32_0 = arith.constant 0 : i32
    return %c0_i32 : i32
  }
  func.func @transform_3(%arg0: i32) -> (i32, i32) {
    %c0_i32 = arith.constant 0 : i32
    %c0_i32_0 = arith.constant 0 : i32
    return %c0_i32, %arg0 : i32, i32
  }
}

</mosaic_0001>

<llo_original>
// kernel: tpu_custom_call.1
$region0: #{tpu_custom_call.1}
  #allocation0 [shape = 'u32[]', space=smem, size = 0x4, offset = 0x4, fixed_abs, tag = 'smem constant byte address 0x4 - core index']
  #allocation1 [shape = 'u32[72,128]{1,0:T(1,128)}', space=vmem, size = 0x9000, scoped, tag = 'internal scratch']
  #allocation2 [shape = 'f32[1]{0:T(128)S(6)}', space=smem, size = 0x200, scoped, tag = 'scoped memory for tpu_custom_call.1']
  %s0 = inlined_call_operand.hbm [shape: f32[8,32], index: 0, kind: input, shape index: {}]
  %s1 = inlined_call_operand.vmem [shape: f32[1,32], index: 1, kind: input, shape index: {}]
  %s2 = inlined_call_operand.<no memory space> [shape: f32[1], index: 2, kind: input, shape index: {}]
  %s3 = inlined_call_operand.hbm [shape: f32[1,8], index: 3, kind: output, shape index: {}]
  %s4 = sld [smem:[#allocation0]]
  $region26: #{tpu_custom_call.1} parent=0
    _
  %s6 = ssub.s32 1, %s4
  %s7 = scalar_select 0, %s6, %s4
  %8 = sst [smem:[#allocation2]] %s2
  $region1: #{tpu_custom_call.1} parent=0
    #allocation3 [shape = 'u8[4096]{0}', space=vmem, size = 0x1000, scoped, tag = 'input window, operand 0, single buffered']
    #allocation4 [shape = 's32[1]{0}', space=sflag, size = 0x4, scoped, tag = 'scoped memory for tpu_custom_call.1']
    #allocation5 [shape = 's32[1]{0}', space=sflag, size = 0x4, scoped, tag = 'scoped memory for tpu_custom_call.1']
    #allocation6 [shape = 'u8[512]{0}', space=vmem, size = 0x400, scoped, tag = 'output window, operand 0, single buffered']
    %9 = vsyncpa [#allocation4], 0
    %10 = vsyncpa [#allocation5], 0
    // Predicated region
    $region2: #{tpu_custom_call.1} parent=1 // pred_check
      _
    $region3: #{tpu_custom_call.1} parent=1 // pred_check_branch
      %12 = sbr.rel (0) target = $region5
    $region4: #{tpu_custom_call.1} parent=1 // pred_region
      %14 = vsyncadd [#allocation4], 0
      %s16 = sshll.u32 %s0, 4
      %s17 = int_to_ptr.hbm [resolvable:$true] %s16
      %s18 = sshll.u32 [#allocation3], 4
      %s19 = int_to_ptr.vmem [resolvable:$true] %s18
      %21 = dma.hbm_to_vmem [thread:$0]  %s17, 128, %s19, [#allocation4]
    $region5: #{tpu_custom_call.1} parent=1 // pred_fallthru
      _
    // Predicated region
    $region6: #{tpu_custom_call.1} parent=1 // pred_check
      _
    $region7: #{tpu_custom_call.1} parent=1 // pred_check_branch
      %23 = sbr.rel (0) target = $region9
    $region8: #{tpu_custom_call.1} parent=1 // pred_region
      _
    $region9: #{tpu_custom_call.1} parent=1 // pred_fallthru
      _
    // Predicated region
    $region10: #{tpu_custom_call.1} parent=1 // pred_check
      _
    $region11: #{tpu_custom_call.1} parent=1 // pred_check_branch
      %25 = sbr.rel (0) target = $region13
    $region12: #{tpu_custom_call.1} parent=1 // pred_region
      _
    $region13: #{tpu_custom_call.1} parent=1 // pred_fallthru
      _
    // Predicated region
    $region14: #{tpu_custom_call.1} parent=1 // pred_check
      _
    $region15: #{tpu_custom_call.1} parent=1 // pred_check_branch
      %27 = sbr.rel (0) target = $region17
    $region16: #{tpu_custom_call.1} parent=1 // pred_region
      %29 = dma.done [#allocation4], 128
    $region17: #{tpu_custom_call.1} parent=1 // pred_fallthru
      _
    %v30 = vld [vmem:[%s1] sm:$0x1]
    %v31 = vld [vmem:[#allocation3] sm:$0xff]
    %s32 = sld [smem:[#allocation2]]
    %v33 = vstv %s32
    %vm34 = vcmask 261120
    %v36 = vsel %vm34, %v30, 0
    %v39 = vsel %vm34, %v31, 0
    %41 = vmatpush.xpose.msra.mxu0 0.0
    %42 = vmatpush.xpose.msra.mxu0 0.0
    %43 = vmatpush.xpose.msra.mxu0 0.0
    %44 = vmatpush.xpose.msra.mxu0 0.0
    %45 = vmatpush.xpose.msra.mxu0 0.0
    %46 = vmatpush.xpose.msra.mxu0 0.0
    %47 = vmatpush.xpose.msra.mxu0 0.0
    %48 = vmatpush.xpose.msra.mxu0 0.0
    %49 = vmatpush.xpose.msra.mxu0 0.0
    %50 = vmatpush.xpose.msra.mxu0 0.0
    %51 = vmatpush.xpose.msra.mxu0 0.0
    %52 = vmatpush.xpose.msra.mxu0 0.0
    %53 = vmatpush.xpose.msra.mxu0 0.0
    %54 = vmatpush.xpose.msra.mxu0 0.0
    %55 = vmatpush.xpose.msra.mxu0 0.0
    %56 = vmatpush.xpose.msra.mxu0 %v39
    %57 = vmatmul.f32.gmra.mxu0 %v36
    %v58 = vpop.f32.mrf.mxu0
    %v59 = vadd.f32 %v33, %v58
    %60 = vdwg.mxu0
    %vm61 = vcmask 57344
    %62 = vst.msk [vmem:[#allocation6] sm:$0x1] %vm61, %v59
    // Predicated region
    $region18: #{tpu_custom_call.1} parent=1 // pred_check
      _
    $region19: #{tpu_custom_call.1} parent=1 // pred_check_branch
      %64 = sbr.rel (0) target = $region21
    $region20: #{tpu_custom_call.1} parent=1 // pred_region
      %66 = vsyncadd [#allocation5], 0
      %s68 = sshll.u32 [#allocation6], 4
      %s69 = int_to_ptr.vmem [resolvable:$true] %s68
      %s70 = sshll.u32 %s3, 4
      %s71 = int_to_ptr.hbm [resolvable:$true] %s70
      %73 = dma.vmem_to_hbm [thread:$0]  %s69, 16, %s71, [#allocation5]
    $region21: #{tpu_custom_call.1} parent=1 // pred_fallthru
      _
    // Predicated region
    $region22: #{tpu_custom_call.1} parent=1 // pred_check
      _
    $region23: #{tpu_custom_call.1} parent=1 // pred_check_branch
      %75 = sbr.rel (0) target = $region25
    $region24: #{tpu_custom_call.1} parent=1 // pred_region
      %77 = dma.done [#allocation5], 16
    $region25: #{tpu_custom_call.1} parent=1 // pred_fallthru
      _
    %78 = vsyncpa [#allocation4], 1
    %79 = vsyncpa [#allocation5], 1

</llo_original>
